<compile_context>
chip_gen: v7x
topology: tpu7x:2x2x1
jax: 0.10.0
libtpu: 0.0.40
codegen_flags: <defaults>
</compile_context>

<pallas_src>
import math

import jax
import jax.numpy as jnp
import numpy as np
from jax.experimental import pallas as pl
from jax.experimental.pallas import tpu as pltpu


# ----------------------------------------------------------------------------
# Deterministic "parameters" (same constants the PyTorch module builds).
# ----------------------------------------------------------------------------
RGB_FROM_HED = np.array([[0.65, 0.70, 0.29],
                         [0.07, 0.99, 0.11],
                         [0.27, 0.57, 0.78]], dtype=np.float32)
HED_FROM_RGB = np.linalg.inv(RGB_FROM_HED).astype(np.float32)
COEFFS = np.array([0.2125, 0.7154, 0.0721], dtype=np.float32)
ALPHA = 1.8
ADJUST_CAL = float(10.0 ** (-math.e ** (1.0 / ALPHA)))
LOG_ADJUST = float(np.log(np.float32(1e-6)))
THRESH_FOD = 0.15
THRESH_MASK = 0.68
INV_LN10 = float(1.0 / math.log(10.0))

# Folded per-pixel coefficients (removes 3 divides + extra multiplies):
#   dab    = max( sum_i ln(rgb_i) * (hed_from_rgb[i,2] / log_adjust), 0 )
#   rgb_j  = exp( dab * (log_adjust * rgb_from_hed[2,j]) )       in (0, 1]
H2S = tuple(float(v) for v in (HED_FROM_RGB[:, 2] / np.float32(LOG_ADJUST)))
CEXP = tuple(float(v) for v in (np.float32(LOG_ADJUST) * RGB_FROM_HED[2, :]))
COEF = tuple(float(v) for v in COEFFS)


# ----------------------------------------------------------------------------
# Kernel: one grid step per (batch element, row tile).
# ----------------------------------------------------------------------------
def _compute_od_kernel(x_ref, fod_ref, mask_ref, avg_ref):
    # x_ref block: (1, 3, TH, W)
    r = x_ref[0, 0, :, :]
    g = x_ref[0, 1, :, :]
    b = x_ref[0, 2, :, :]

    eps = jnp.float32(1e-6)
    lr = jnp.log(jnp.maximum(r, eps))
    lg = jnp.log(jnp.maximum(g, eps))
    lb = jnp.log(jnp.maximum(b, eps))

    # separate_stains: only the DAB stain (column 2 of hed_from_rgb) survives
    # downstream; the 1/log_adjust is folded into H2S.
    dab = jnp.maximum(lr * H2S[0] + lg * H2S[1] + lb * H2S[2], 0.0)

    # combine_stains on (0, 0, dab) followed by rgb2gray.  exp argument is
    # always <= 0, so the per-channel clamp to [0,1] is a no-op and dropped.
    grey = (jnp.exp(dab * CEXP[0]) * COEF[0]
            + jnp.exp(dab * CEXP[1]) * COEF[1]
            + jnp.exp(dab * CEXP[2]) * COEF[2])
    grey = jnp.clip(grey, 0.0, 1.0)            # grey_d[<0]=0, [>1]=1 (cheap VPU)

    # FOD = log10(1/(grey+cal)) == -ln(grey+cal)/ln(10); clamp at 0; then **alpha
    # written explicitly as exp(alpha*log(x)) with a zero guard (fod >= 0).
    fod_lin = jnp.maximum(-jnp.log(grey + ADJUST_CAL) * INV_LN10, 0.0)
    fod = jnp.where(
        fod_lin > 0.0,
        jnp.exp(ALPHA * jnp.log(jnp.maximum(fod_lin, jnp.float32(1e-30)))),
        0.0)

    fod_relu = jnp.where(fod < THRESH_FOD, 0.0, fod)
    mask = jnp.where(fod < THRESH_MASK, 0.0, 1.0)   # mask_OD[>0] = 1

    # Fused output transpose: (TH, W) -> (W, TH) on the XLU (idle slot here),
    # so the wrapper needs no extra HBM pass.
    fod_ref[0, 0, :, :] = jnp.transpose(fod)
    mask_ref[0, :, :] = mask

    # Per-(batch, row-tile) partial sum of FOD_relu; reduced in the wrapper.
    avg_ref[0, 0, :, :] = jnp.sum(fod_relu, keepdims=True)


def _pick_row_tile(h):
    """Row-tile height: whole image if small, else a multiple of 128."""
    if h <= 512:
        return h
    for th in (512, 384, 256, 128):
        if h % th == 0:
            return th
    return h  # fallback: whole-image rows


# ----------------------------------------------------------------------------
# Wrapper: ComputeODModule.forward(src) -> (inputs_OD, input_avg_OD, input_msk)
# ----------------------------------------------------------------------------
def compute_od_forward(src):
    B, C, H, W = src.shape
    assert C == 3, "expected RGB input in NCHW"
    src = src.astype(jnp.float32)

    TH = _pick_row_tile(H)
    nH = H // TH

    npix = B * H * W
    cost = pl.CostEstimate(
        flops=30 * npix,
        transcendentals=9 * npix,
        bytes_accessed=20 * npix + 4 * B * nH,
    )

    out_shapes = (
        jax.ShapeDtypeStruct((B, 1, W, H), jnp.float32),   # FOD, pre-transposed
        jax.ShapeDtypeStruct((B, H, W), jnp.float32),      # mask_OD
        jax.ShapeDtypeStruct((B, nH, 1, 1), jnp.float32),  # partial FOD_relu sums
    )

    grid_spec = pltpu.PrefetchScalarGridSpec(
        num_scalar_prefetch=0,
        grid=(B, nH),
        in_specs=[pl.BlockSpec((1, 3, TH, W), lambda b, h: (b, 0, h, 0))],
        out_specs=[
            pl.BlockSpec((1, 1, W, TH), lambda b, h: (b, 0, 0, h)),
            pl.BlockSpec((1, TH, W), lambda b, h: (b, h, 0)),
            pl.BlockSpec((1, 1, 1, 1), lambda b, h: (b, h, 0, 0)),
        ],
    )

    fod_t, mask, partial = pl.pallas_call(
        _compute_od_kernel,
        out_shape=out_shapes,
        grid_spec=grid_spec,
        compiler_params=pltpu.CompilerParams(
            dimension_semantics=("parallel", "parallel")),
        cost_estimate=cost,
    )(src)

    inputs_od = fod_t                                   # (B, 1, W, H), already permuted
    input_avg_od = jnp.sum(partial[:, :, 0, 0], axis=1) # (B,)  sum of FOD_relu
    input_msk = mask                                    # (B, H, W)
    return inputs_od, input_avg_od, input_msk


# ----------------------------------------------------------------------------
# Pure-JAX reference mirroring the PyTorch module (for validation only).
# ----------------------------------------------------------------------------
def _reference_forward(src):
    img = jnp.transpose(src.astype(jnp.float32), (0, 2, 3, 1))   # (B,H,W,3)
    hed_from_rgb = jnp.asarray(HED_FROM_RGB)
    rgb_from_hed = jnp.asarray(RGB_FROM_HED)
    coeffs = jnp.asarray(COEFFS).reshape(3, 1)

    rgb = jnp.maximum(img, 1e-6)
    stains = jnp.maximum(jnp.matmul(jnp.log(rgb) / LOG_ADJUST, hed_from_rgb), 0.0)
    null = jnp.zeros_like(stains[..., 0])
    d_only = jnp.stack([null, null, stains[..., 2]], axis=-1)
    log_rgb = -jnp.matmul(d_only * (-LOG_ADJUST), rgb_from_hed)
    ihc_d = jnp.clip(jnp.exp(log_rgb), 0.0, 1.0)
    grey_d = jnp.clip(jnp.matmul(ihc_d, coeffs), 0.0, 1.0)        # (B,H,W,1)

    fod = jnp.log10(1.0 / (grey_d + ADJUST_CAL))
    fod = jnp.where(fod < 0.0, 0.0, fod)
    fod = fod ** ALPHA
    fod_relu = jnp.where(fod < THRESH_FOD, 0.0, fod)
    mask = jnp.where(fod < THRESH_MASK, 0.0, fod)[..., 0]
    mask = jnp.where(mask > 0.0, 1.0, 0.0)
    avg = jnp.sum(fod_relu, axis=(1, 2, 3))
    inputs_od = jnp.transpose(fod, (0, 3, 2, 1))                  # (B,1,W,H)
    return inputs_od, avg, mask, fod


if __name__ == "__main__":
    key = jax.random.PRNGKey(0)
    B, C, H, W = 2, 3, 16, 16
    src = jax.random.uniform(key, (B, C, H, W), dtype=jnp.float32,
                             minval=0.0, maxval=1.0)

    inputs_od, input_avg_od, input_msk = jax.block_until_ready(
        compute_od_forward(src))

    assert inputs_od.shape == (B, 1, W, H)
    assert input_avg_od.shape == (B,)
    assert input_msk.shape == (B, H, W)
    assert bool(jnp.all(jnp.isfinite(inputs_od)))

    # Validate against the pure-JAX reference of the PyTorch forward.
    ref_od, ref_avg, ref_msk, ref_fod = _reference_forward(src)
    assert float(jnp.max(jnp.abs(inputs_od - ref_od))) < 1e-3
    assert bool(jnp.allclose(input_avg_od, ref_avg, rtol=1e-3, atol=2e-1))
    # Mask may only differ where FOD sits within float noise of the threshold.
    mask_diff = input_msk != ref_msk
    near_thresh = jnp.abs(ref_fod[..., 0] - THRESH_MASK) < 1e-3
    assert bool(jnp.all(jnp.logical_or(~mask_diff, near_thresh)))

    print("KERNEL_OK")
</pallas_src>

<mosaic_0001>
module attributes {stable_mosaic.version = 11 : i64} {
  func.func @_compute_od_kernel(%arg0: i32, %arg1: i32, %arg2: memref<1x3x16x16xf32, #tpu.memory_space<vmem>>, %arg3: memref<1x1x16x16xf32, #tpu.memory_space<vmem>>, %arg4: memref<1x16x16xf32, #tpu.memory_space<vmem>>, %arg5: memref<1x1x1x1xf32, #tpu.memory_space<vmem>>) attributes {dimension_semantics = [#tpu.dimension_semantics<parallel>, #tpu.dimension_semantics<parallel>], iteration_bounds = array<i64: 2, 1>, scalar_prefetch = 0 : i64, scratch_operands = 0 : i64, tpu.core_type = #tpu.core_type<tc>, window_params = [{transform_indices = @transform_0, window_bounds = array<i64: 1, 3, 16, 16>}, {transform_indices = @transform_1, window_bounds = array<i64: 1, 1, 16, 16>}, {transform_indices = @transform_2, window_bounds = array<i64: 1, 16, 16>}, {transform_indices = @transform_3, window_bounds = array<i64: 1, 1, 1, 1>}]} {
    %c0 = arith.constant 0 : index
    %c0_0 = arith.constant 0 : index
    %c0_1 = arith.constant 0 : index
    %c0_2 = arith.constant 0 : index
    %0 = vector.load %arg2[%c0, %c0_0, %c0_1, %c0_2] : memref<1x3x16x16xf32, #tpu.memory_space<vmem>>, vector<1x1x16x16xf32>
    %1 = vector.shape_cast %0 : vector<1x1x16x16xf32> to vector<16x16xf32>
    %c0_3 = arith.constant 0 : index
    %c1 = arith.constant 1 : index
    %c0_4 = arith.constant 0 : index
    %c0_5 = arith.constant 0 : index
    %2 = vector.load %arg2[%c0_3, %c1, %c0_4, %c0_5] : memref<1x3x16x16xf32, #tpu.memory_space<vmem>>, vector<1x1x16x16xf32>
    %3 = vector.shape_cast %2 : vector<1x1x16x16xf32> to vector<16x16xf32>
    %c0_6 = arith.constant 0 : index
    %c2 = arith.constant 2 : index
    %c0_7 = arith.constant 0 : index
    %c0_8 = arith.constant 0 : index
    %4 = vector.load %arg2[%c0_6, %c2, %c0_7, %c0_8] : memref<1x3x16x16xf32, #tpu.memory_space<vmem>>, vector<1x1x16x16xf32>
    %5 = vector.shape_cast %4 : vector<1x1x16x16xf32> to vector<16x16xf32>
    %cst = arith.constant 9.99999997E-7 : f32
    %6 = vector.broadcast %cst : f32 to vector<16x16xf32>
    %7 = arith.maximumf %1, %6 : vector<16x16xf32>
    %8 = math.log %7 : vector<16x16xf32>
    %cst_9 = arith.constant 9.99999997E-7 : f32
    %9 = vector.broadcast %cst_9 : f32 to vector<16x16xf32>
    %10 = arith.maximumf %3, %9 : vector<16x16xf32>
    %11 = math.log %10 : vector<16x16xf32>
    %cst_10 = arith.constant 9.99999997E-7 : f32
    %12 = vector.broadcast %cst_10 : f32 to vector<16x16xf32>
    %13 = arith.maximumf %5, %12 : vector<16x16xf32>
    %14 = math.log %13 : vector<16x16xf32>
    %cst_11 = arith.constant 0.0402530096 : f32
    %15 = vector.broadcast %cst_11 : f32 to vector<16x16xf32>
    %16 = arith.mulf %8, %15 : vector<16x16xf32>
    %cst_12 = arith.constant 0.00980939437 : f32
    %17 = vector.broadcast %cst_12 : f32 to vector<16x16xf32>
    %18 = arith.mulf %11, %17 : vector<16x16xf32>
    %19 = arith.addf %16, %18 : vector<16x16xf32>
    %cst_13 = arith.constant -0.113900103 : f32
    %20 = vector.broadcast %cst_13 : f32 to vector<16x16xf32>
    %21 = arith.mulf %14, %20 : vector<16x16xf32>
    %22 = arith.addf %19, %21 : vector<16x16xf32>
    %cst_14 = arith.constant 0.000000e+00 : f32
    %23 = vector.broadcast %cst_14 : f32 to vector<16x16xf32>
    %24 = arith.maximumf %22, %23 : vector<16x16xf32>
    %cst_15 = arith.constant -3.73018813 : f32
    %25 = vector.broadcast %cst_15 : f32 to vector<16x16xf32>
    %26 = arith.mulf %24, %25 : vector<16x16xf32>
    %27 = math.exp %26 : vector<16x16xf32>
    %cst_16 = arith.constant 2.125000e-01 : f32
    %28 = vector.broadcast %cst_16 : f32 to vector<16x16xf32>
    %29 = arith.mulf %27, %28 : vector<16x16xf32>
    %cst_17 = arith.constant -7.87484121 : f32
    %30 = vector.broadcast %cst_17 : f32 to vector<16x16xf32>
    %31 = arith.mulf %24, %30 : vector<16x16xf32>
    %32 = math.exp %31 : vector<16x16xf32>
    %cst_18 = arith.constant 7.154000e-01 : f32
    %33 = vector.broadcast %cst_18 : f32 to vector<16x16xf32>
    %34 = arith.mulf %32, %33 : vector<16x16xf32>
    %35 = arith.addf %29, %34 : vector<16x16xf32>
    %cst_19 = arith.constant -10.7760983 : f32
    %36 = vector.broadcast %cst_19 : f32 to vector<16x16xf32>
    %37 = arith.mulf %24, %36 : vector<16x16xf32>
    %38 = math.exp %37 : vector<16x16xf32>
    %cst_20 = arith.constant 7.210000e-02 : f32
    %39 = vector.broadcast %cst_20 : f32 to vector<16x16xf32>
    %40 = arith.mulf %38, %39 : vector<16x16xf32>
    %41 = arith.addf %35, %40 : vector<16x16xf32>
    %cst_21 = arith.constant 0.000000e+00 : f32
    %cst_22 = arith.constant 1.000000e+00 : f32
    %42 = vector.broadcast %cst_21 : f32 to vector<16x16xf32>
    %43 = arith.maximumf %42, %41 : vector<16x16xf32>
    %44 = vector.broadcast %cst_22 : f32 to vector<16x16xf32>
    %45 = arith.minimumf %44, %43 : vector<16x16xf32>
    %cst_23 = arith.constant 0.0180755276 : f32
    %46 = vector.broadcast %cst_23 : f32 to vector<16x16xf32>
    %47 = arith.addf %45, %46 : vector<16x16xf32>
    %48 = math.log %47 : vector<16x16xf32>
    %cst_24 = arith.constant 0.000000e+00 : f32
    %49 = vector.broadcast %cst_24 : f32 to vector<16x16xf32>
    %50 = arith.subf %49, %48 : vector<16x16xf32>
    %cst_25 = arith.constant 0.434294492 : f32
    %51 = vector.broadcast %cst_25 : f32 to vector<16x16xf32>
    %52 = arith.mulf %50, %51 : vector<16x16xf32>
    %cst_26 = arith.constant 0.000000e+00 : f32
    %53 = vector.broadcast %cst_26 : f32 to vector<16x16xf32>
    %54 = arith.maximumf %52, %53 : vector<16x16xf32>
    %cst_27 = arith.constant 0.000000e+00 : f32
    %55 = vector.broadcast %cst_27 : f32 to vector<16x16xf32>
    %56 = arith.cmpf ogt, %54, %55 : vector<16x16xf32>
    %cst_28 = arith.constant 1.000000e-30 : f32
    %57 = vector.broadcast %cst_28 : f32 to vector<16x16xf32>
    %58 = arith.maximumf %54, %57 : vector<16x16xf32>
    %59 = math.log %58 : vector<16x16xf32>
    %cst_29 = arith.constant 1.800000e+00 : f32
    %60 = vector.broadcast %cst_29 : f32 to vector<16x16xf32>
    %61 = arith.mulf %60, %59 : vector<16x16xf32>
    %62 = math.exp %61 : vector<16x16xf32>
    %cst_30 = arith.constant 0.000000e+00 : f32
    %63 = vector.broadcast %cst_30 : f32 to vector<16x16xf32>
    %64 = arith.select %56, %62, %63 : vector<16x16xi1>, vector<16x16xf32>
    %cst_31 = arith.constant 1.500000e-01 : f32
    %65 = vector.broadcast %cst_31 : f32 to vector<16x16xf32>
    %66 = arith.cmpf olt, %64, %65 : vector<16x16xf32>
    %cst_32 = arith.constant 0.000000e+00 : f32
    %67 = vector.broadcast %cst_32 : f32 to vector<16x16xf32>
    %68 = arith.select %66, %67, %64 : vector<16x16xi1>, vector<16x16xf32>
    %cst_33 = arith.constant 6.800000e-01 : f32
    %69 = vector.broadcast %cst_33 : f32 to vector<16x16xf32>
    %70 = arith.cmpf olt, %64, %69 : vector<16x16xf32>
    %cst_34 = arith.constant 0.000000e+00 : f32
    %cst_35 = arith.constant 1.000000e+00 : f32
    %71 = vector.broadcast %cst_34 : f32 to vector<16x16xf32>
    %72 = vector.broadcast %cst_35 : f32 to vector<16x16xf32>
    %73 = arith.select %70, %71, %72 : vector<16x16xi1>, vector<16x16xf32>
    %74 = tpu.transpose %64, [1, 0] : vector<16x16xf32> -> vector<16x16xf32>
    %c0_36 = arith.constant 0 : index
    %c0_37 = arith.constant 0 : index
    %c0_38 = arith.constant 0 : index
    %c0_39 = arith.constant 0 : index
    %75 = vector.load %arg3[%c0_36, %c0_37, %c0_38, %c0_39] : memref<1x1x16x16xf32, #tpu.memory_space<vmem>>, vector<1x1x16x16xf32>
    %76 = vector.shape_cast %75 : vector<1x1x16x16xf32> to vector<16x16xf32>
    %77 = vector.shape_cast %74 : vector<16x16xf32> to vector<1x1x16x16xf32>
    tpu.vector_store %arg3[%c0_36, %c0_37, %c0_38, %c0_39], %77 {strides = array<i32>} : memref<1x1x16x16xf32, #tpu.memory_space<vmem>>, vector<1x1x16x16xf32>,
    %c0_40 = arith.constant 0 : index
    %c0_41 = arith.constant 0 : index
    %c0_42 = arith.constant 0 : index
    %78 = vector.load %arg4[%c0_40, %c0_41, %c0_42] : memref<1x16x16xf32, #tpu.memory_space<vmem>>, vector<1x16x16xf32>
    %79 = vector.shape_cast %78 : vector<1x16x16xf32> to vector<16x16xf32>
    %80 = vector.shape_cast %73 : vector<16x16xf32> to vector<1x16x16xf32>
    tpu.vector_store %arg4[%c0_40, %c0_41, %c0_42], %80 {strides = array<i32>} : memref<1x16x16xf32, #tpu.memory_space<vmem>>, vector<1x16x16xf32>,
    %81 = vector.shape_cast %68 : vector<16x16xf32> to vector<1x16x16xf32>
    %cst_43 = arith.constant dense<0.000000e+00> : vector<1xf32>
    %82 = vector.multi_reduction <add>, %81, %cst_43 [1, 2] : vector<1x16x16xf32> to vector<1xf32>
    %83 = vector.shape_cast %82 : vector<1xf32> to vector<1x1x1xf32>
    %84 = vector.extract %83[0, 0, 0] : f32 from vector<1x1x1xf32>
    %85 = vector.broadcast %84 : f32 to vector<1x1xf32>
    %c0_44 = arith.constant 0 : index
    %c0_45 = arith.constant 0 : index
    %c0_46 = arith.constant 0 : index
    %c0_47 = arith.constant 0 : index
    %86 = vector.load %arg5[%c0_44, %c0_45, %c0_46, %c0_47] : memref<1x1x1x1xf32, #tpu.memory_space<vmem>>, vector<1x1x1x1xf32>
    %87 = vector.shape_cast %86 : vector<1x1x1x1xf32> to vector<1x1xf32>
    %88 = vector.shape_cast %85 : vector<1x1xf32> to vector<1x1x1x1xf32>
    tpu.vector_store %arg5[%c0_44, %c0_45, %c0_46, %c0_47], %88 {strides = array<i32>} : memref<1x1x1x1xf32, #tpu.memory_space<vmem>>, vector<1x1x1x1xf32>,
    return
  }
  func.func @transform_0(%arg0: i32, %arg1: i32) -> (i32, i32, i32, i32) {
    %c0_i32 = arith.constant 0 : i32
    %c0_i32_0 = arith.constant 0 : i32
    %c0_i32_1 = arith.constant 0 : i32
    return %arg0, %c0_i32, %arg1, %c0_i32_0 : i32, i32, i32, i32
  }
  func.func @transform_1(%arg0: i32, %arg1: i32) -> (i32, i32, i32, i32) {
    %c0_i32 = arith.constant 0 : i32
    %c0_i32_0 = arith.constant 0 : i32
    %c0_i32_1 = arith.constant 0 : i32
    return %arg0, %c0_i32, %c0_i32_0, %arg1 : i32, i32, i32, i32
  }
  func.func @transform_2(%arg0: i32, %arg1: i32) -> (i32, i32, i32) {
    %c0_i32 = arith.constant 0 : i32
    %c0_i32_0 = arith.constant 0 : i32
    return %arg0, %arg1, %c0_i32 : i32, i32, i32
  }
  func.func @transform_3(%arg0: i32, %arg1: i32) -> (i32, i32, i32, i32) {
    %c0_i32 = arith.constant 0 : i32
    %c0_i32_0 = arith.constant 0 : i32
    %c0_i32_1 = arith.constant 0 : i32
    return %arg0, %arg1, %c0_i32, %c0_i32_0 : i32, i32, i32, i32
  }
}

</mosaic_0001>

<llo_original>
// kernel: tpu_custom_call.1
$region0: #{tpu_custom_call.1}
  #allocation0 [shape = 'u32[]', space=smem, size = 0x4, offset = 0x4, fixed_abs, tag = 'smem constant byte address 0x4 - core index']
  #allocation1 [shape = 'u32[144,128]{1,0:T(1,128)}', space=vmem, size = 0x12000, scoped, tag = 'internal scratch']
  %s0 = inlined_call_operand.hbm [shape: f32[2,3,16,16], index: 0, kind: input, shape index: {}]
  %s1 = inlined_call_operand.hbm [shape: f32[2,1,16,16], index: 1, kind: output, shape index: {0}]
  %s2 = inlined_call_operand.hbm [shape: f32[2,16,16], index: 2, kind: output, shape index: {1}]
  %s3 = inlined_call_operand.vmem [shape: f32[2,1,1,1], index: 3, kind: output, shape index: {2}]
  %4 = xla_tuple %s1, %s2, %s3
  %s5 = sld [smem:[#allocation0]]
  $region57: #{tpu_custom_call.1} parent=0
    _
  %s7 = ssub.s32 1, %s5
  %s8 = scalar_select 0, %s7, %s5
  $region1: #{tpu_custom_call.1} parent=0
    #allocation2 [shape = 'u8[49152]{0}', space=vmem, size = 0xc000, scoped, tag = 'input window, operand 0']
    #allocation3 [shape = 's32[2]{0}', space=sflag, size = 0x8, scoped, tag = 'scoped memory for tpu_custom_call.1']
    #allocation4 [shape = 's32[2]{0}', space=sflag, size = 0x8, scoped, tag = 'scoped memory for tpu_custom_call.1']
    #allocation5 [shape = 'u8[16384]{0}', space=vmem, size = 0x4000, scoped, tag = 'output window, operand 0']
    #allocation6 [shape = 'u8[16384]{0}', space=vmem, size = 0x4000, scoped, tag = 'output window, operand 1']
    #allocation7 [shape = 's32[2]{0}', space=sflag, size = 0x8, scoped, tag = 'scoped memory for tpu_custom_call.1']
    %9 = vsyncpa [#allocation3], 0
    %s10 = scalar_lea.sflag [#allocation3], 1
    %11 = vsyncpa %s10, 0
    %12 = vsyncpa [#allocation4], 0
    %s13 = scalar_lea.sflag [#allocation4], 1
    %14 = vsyncpa %s13, 0
    %15 = vsyncpa [#allocation7], 0
    %s16 = scalar_lea.sflag [#allocation7], 1
    %17 = vsyncpa %s16, 0
    loop: start=0, step=1, limit=4
    $region2: #{tpu_custom_call.1} parent=1 // loop_pre_header
      _
    $region3: #{tpu_custom_call.1} parent=1 // loop_header
      %s19 = sphi 0, %s23
      %p20 = scmp.ge.s32.totalorder %s19, 4
      %s26 = sphi 0, %s38
      %s27 = sphi 0, %s34
      %s28 = sphi 0, %s26
      %s29 = sphi 0, %s27
      %s30 = sphi 0, %s28
      %s31 = sphi 0, %s29
      %s43 = sphi 0, %s45
      %s46 = sphi 0, %s43
      %s47 = sphi 0, %s46
      %s63 = sphi 0, %s47
      %s71 = sphi 0, %s73
      %s74 = sphi 0, %s71
      %s75 = sphi 0, %s74
      %s91 = sphi 0, %s75
      %s99 = sphi 0, %s101
      %s102 = sphi 0, %s99
      %s103 = sphi 0, %s102
      %s119 = sphi 0, %s103
      %s127 = sphi 0, %s129
      %s130 = sphi 0, %s127
      %s131 = sphi 0, %s130
      %s147 = sphi 0, %s131
    $region4: #{tpu_custom_call.1} parent=1 // loop_header_branch
      %22 = sbr.rel (%p20) target = $region8
    $region5: #{tpu_custom_call.1} parent=1 // loop_body
      %s24 = ssub.s32 %s19, 1
      %s25 = ssub.s32 %s19, 2
      %s32 = sadd.s32 1, %s27
      %p33 = scmp.ge.s32.totalorder %s32, 1
      %s34 = scalar_select %p33, 0, %s32
      %s35 = sadd.s32 1, %s26
      %s36 = scalar_select %p33, %s35, %s26
      %p37 = scmp.ge.s32.totalorder %s36, 2
      %s38 = scalar_select %p37, 0, %s36
      %s39 = ssub.s32 %s26, %s38
      %s40 = ssub.s32 %s27, %s34
      %s41 = sor.u32 %s39, %s40
      %p42 = scmp.eq.s32.totalorder %s41, 0
      %s44 = sadd.s32 %s43, 1
      %s45 = scalar_select %p42, %s43, %s44
      %p48 = pneg %p42
      %p49 = scmp.eq.s32.totalorder %s19, 1
      %p50 = por %p48, %p49
      %p51 = scmp.ne.s32.totalorder %s43, %s46
      %p52 = scmp.eq.s32.totalorder %s19, 0
      %p53 = por %p51, %p52
      %p54 = scmp.ne.s32.totalorder %s43, %s46
      %p55 = scmp.eq.s32.totalorder %s24, 1
      %p56 = por %p54, %p55
      %p57 = scmp.ne.s32.totalorder %s46, %s47
      %p58 = scmp.eq.s32.totalorder %s24, 0
      %p59 = por %p57, %p58
      %p60 = scmp.ne.s32.totalorder %s46, %s47
      %p61 = scmp.eq.s32.totalorder %s25, 1
      %p62 = por %p60, %p61
      %p64 = scmp.ne.s32.totalorder %s47, %s63
      %p65 = scmp.eq.s32.totalorder %s25, 0
      %p66 = por %p64, %p65
      %s67 = ssub.s32 %s26, %s38
      %s68 = ssub.s32 %s27, %s34
      %s69 = sor.u32 %s67, %s68
      %p70 = scmp.eq.s32.totalorder %s69, 0
      %s72 = sadd.s32 %s71, 1
      %s73 = scalar_select %p70, %s71, %s72
      %p76 = pneg %p70
      %p77 = scmp.eq.s32.totalorder %s19, 1
      %p78 = por %p76, %p77
      %p79 = scmp.ne.s32.totalorder %s71, %s74
      %p80 = scmp.eq.s32.totalorder %s19, 0
      %p81 = por %p79, %p80
      %p82 = scmp.ne.s32.totalorder %s71, %s74
      %p83 = scmp.eq.s32.totalorder %s24, 1
      %p84 = por %p82, %p83
      %p85 = scmp.ne.s32.totalorder %s74, %s75
      %p86 = scmp.eq.s32.totalorder %s24, 0
      %p87 = por %p85, %p86
      %p88 = scmp.ne.s32.totalorder %s74, %s75
      %p89 = scmp.eq.s32.totalorder %s25, 1
      %p90 = por %p88, %p89
      %p92 = scmp.ne.s32.totalorder %s75, %s91
      %p93 = scmp.eq.s32.totalorder %s25, 0
      %p94 = por %p92, %p93
      %s95 = ssub.s32 %s26, %s38
      %s96 = ssub.s32 %s27, %s34
      %s97 = sor.u32 %s95, %s96
      %p98 = scmp.eq.s32.totalorder %s97, 0
      %s100 = sadd.s32 %s99, 1
      %s101 = scalar_select %p98, %s99, %s100
      %p104 = pneg %p98
      %p105 = scmp.eq.s32.totalorder %s19, 1
      %p106 = por %p104, %p105
      %p107 = scmp.ne.s32.totalorder %s99, %s102
      %p108 = scmp.eq.s32.totalorder %s19, 0
      %p109 = por %p107, %p108
      %p110 = scmp.ne.s32.totalorder %s99, %s102
      %p111 = scmp.eq.s32.totalorder %s24, 1
      %p112 = por %p110, %p111
      %p113 = scmp.ne.s32.totalorder %s102, %s103
      %p114 = scmp.eq.s32.totalorder %s24, 0
      %p115 = por %p113, %p114
      %p116 = scmp.ne.s32.totalorder %s102, %s103
      %p117 = scmp.eq.s32.totalorder %s25, 1
      %p118 = por %p116, %p117
      %p120 = scmp.ne.s32.totalorder %s103, %s119
      %p121 = scmp.eq.s32.totalorder %s25, 0
      %p122 = por %p120, %p121
      %s123 = ssub.s32 %s26, %s38
      %s124 = ssub.s32 %s27, %s34
      %s125 = sor.u32 %s123, %s124
      %p126 = scmp.eq.s32.totalorder %s125, 0
      %s128 = sadd.s32 %s127, 1
      %s129 = scalar_select %p126, %s127, %s128
      %p132 = pneg %p126
      %p133 = scmp.eq.s32.totalorder %s19, 1
      %p134 = por %p132, %p133
      %p135 = scmp.ne.s32.totalorder %s127, %s130
      %p136 = scmp.eq.s32.totalorder %s19, 0
      %p137 = por %p135, %p136
      %p138 = scmp.ne.s32.totalorder %s127, %s130
      %p139 = scmp.eq.s32.totalorder %s24, 1
      %p140 = por %p138, %p139
      %p141 = scmp.ne.s32.totalorder %s130, %s131
      %p142 = scmp.eq.s32.totalorder %s24, 0
      %p143 = por %p141, %p142
      %p144 = scmp.ne.s32.totalorder %s130, %s131
      %p145 = scmp.eq.s32.totalorder %s25, 1
      %p146 = por %p144, %p145
      %p148 = scmp.ne.s32.totalorder %s131, %s147
      %p149 = scmp.eq.s32.totalorder %s25, 0
      %p150 = por %p148, %p149
      %p151 = scmp.le.s32.totalorder 1, %s19
      %p152 = scmp.lt.s32.totalorder %s19, 3
      %p153 = pnand %p151, %p152
      %p154 = pneg %p153
      // Predicated region
      $region9: #{tpu_custom_call.1} parent=5 // pred_check
        _
      $region10: #{tpu_custom_call.1} parent=5 // pred_check_branch
        %156 = sbr.rel (%p153) target = $region12
      $region11: #{tpu_custom_call.1} parent=5 // pred_region
        %s157 = ssub.s32 %s19, 1
      $region12: #{tpu_custom_call.1} parent=5 // pred_fallthru
        _
      %p158 = scmp.lt.s32.totalorder %s19, 2
      // Predicated region
      $region13: #{tpu_custom_call.1} parent=5 // pred_check
        %p159 = pneg %p158
      $region14: #{tpu_custom_call.1} parent=5 // pred_check_branch
        %161 = sbr.rel (%p159) target = $region16
      $region15: #{tpu_custom_call.1} parent=5 // pred_region
        // Predicated region
        $region17: #{tpu_custom_call.1} parent=15 // pred_check
          %p162 = pneg %p53
        $region18: #{tpu_custom_call.1} parent=15 // pred_check_branch
          %164 = sbr.rel (%p162) target = $region20
        $region19: #{tpu_custom_call.1} parent=15 // pred_region
          %s165 = sand.u32 %s43, 1
          %s166 = scalar_lea.sflag [#allocation3], %s165
          %s167 = sand.u32 %s43, 1
          %s168 = smul.addr %s167, 48
          %s169 = scalar_lea.vmem [#allocation2], %s168
          %s170 = smul.u32 2, %s27
          %s172 = ssub.s32 768, 768
          %173 = vsyncadd %s166, %s172
          %s174 = smul.addr %s26, 6
          %s175 = sadd.s32 %s170, %s174
          %s176 = smul.addr %s175, 128
          %s177 = scalar_lea.hbm %s0, %s176
          %s178 = sshll.u32 %s169, 4
          %s179 = int_to_ptr.vmem [resolvable:$true] %s178
          %184 = dma.hbm_to_vmem [thread:$0]  %s177, 768, %s179, %s166, 128, 128, 8
        $region20: #{tpu_custom_call.1} parent=15 // pred_fallthru
          _
      $region16: #{tpu_custom_call.1} parent=5 // pred_fallthru
        _
      %p185 = scmp.le.s32.totalorder 1, %s19
      %p186 = scmp.lt.s32.totalorder %s19, 3
      %p187 = pnand %p185, %p186
      %p188 = pneg %p187
      // Predicated region
      $region21: #{tpu_custom_call.1} parent=5 // pred_check
        _
      $region22: #{tpu_custom_call.1} parent=5 // pred_check_branch
        %190 = sbr.rel (%p187) target = $region24
      $region23: #{tpu_custom_call.1} parent=5 // pred_region
        %s191 = ssub.s32 %s19, 1
        %s192 = sand.u32 %s46, 1
        %s193 = scalar_lea.sflag [#allocation3], %s192
        %s194 = sand.u32 %s46, 1
        %s195 = smul.addr %s194, 48
        %s196 = scalar_lea.vmem [#allocation2], %s195
        // Predicated region
        $region25: #{tpu_custom_call.1} parent=23 // pred_check
          %p197 = pneg %p59
        $region26: #{tpu_custom_call.1} parent=23 // pred_check_branch
          %199 = sbr.rel (%p197) target = $region28
        $region27: #{tpu_custom_call.1} parent=23 // pred_region
          %200 = dma.done %s193, 768
        $region28: #{tpu_custom_call.1} parent=23 // pred_fallthru
          _
        %s201 = sand.u32 %s46, 1
        %s202 = scalar_lea.sflag [#allocation3], %s201
        %s203 = sand.u32 %s46, 1
        %s204 = smul.addr %s203, 48
        %s205 = scalar_lea.vmem [#allocation2], %s204
        %p206 = pneg %p59
        %p207 = pneg %p56
        %p208 = pneg %p87
        %p209 = pneg %p84
        %s210 = sand.u32 %s74, 1
        %s211 = scalar_lea.sflag [#allocation4], %s210
        %s212 = sand.u32 %s74, 1
        %s213 = smul.addr %s212, 16
        %s214 = scalar_lea.vmem [#allocation5], %s213
        %p215 = pneg %p115
        %p216 = pneg %p112
        %s217 = sand.u32 %s102, 1
        %s218 = scalar_lea.sflag [#allocation7], %s217
        %s219 = sand.u32 %s102, 1
        %s220 = smul.addr %s219, 16
        %s221 = scalar_lea.vmem [#allocation6], %s220
        %p222 = pneg %p143
        %p223 = pneg %p140
        %p224 = scmp.lt.s32.totalorder %s28, 1
        %s225 = scalar_select %p224, %s28, 1
        %p226 = scmp.lt.s32.totalorder %s29, 0
        %s227 = scalar_select %p226, %s29, 0
        %s228 = sadd.s32 %s227, %s225
        %s229 = scalar_lea.vmem %s3, %s228
        %s230 = smul.u32 2, %s29
        %s231 = smul.u32 2, %s29
        %p232 = scmp.lt.s32.totalorder %s28, 1
        %s233 = scalar_select %p232, %s28, 1
        %p234 = scmp.lt.s32.totalorder %s29, 0
        %s235 = scalar_select %p234, %s29, 0
        %s236 = sadd.s32 %s235, %s233
        %s237 = scalar_lea.vmem %s3, %s236
        %v238 = vld [vmem:[%s196] sm:$0xff]
        %v239 = vld [vmem:[%s196 + $0x8] sm:$0xff]
        %s240 = scalar_lea.vmem %s196, 16 [#allocation2]
        %v241 = vld [vmem:[%s240] sm:$0xff]
        %v242 = vld [vmem:[%s240 + $0x8] sm:$0xff]
        %s243 = scalar_lea.vmem %s196, 32 [#allocation2]
        %v244 = vld [vmem:[%s243] sm:$0xff]
        %v245 = vld [vmem:[%s243 + $0x8] sm:$0xff]
        %v246 = vmax.f32 %v238, 1e-06
        %v247 = vmax.f32 %v239, 1e-06
        %v248 = vlog2.pop %v246
        %v249 = vmul.f32 %v248, 0.6931472
        %v250 = vlog2.pop %v247
        %v251 = vmul.f32 %v250, 0.6931472
        %v252 = vmax.f32 %v241, 1e-06
        %v253 = vmax.f32 %v242, 1e-06
        %v254 = vlog2.pop %v252
        %v255 = vmul.f32 %v254, 0.6931472
        %v256 = vlog2.pop %v253
        %v257 = vmul.f32 %v256, 0.6931472
        %v258 = vmax.f32 %v244, 1e-06
        %v259 = vmax.f32 %v245, 1e-06
        %v260 = vlog2.pop %v258
        %v261 = vmul.f32 %v260, 0.6931472
        %v262 = vlog2.pop %v259
        %v263 = vmul.f32 %v262, 0.6931472
        %v264 = vmul.f32 %v249, 0.04025301
        %v265 = vmul.f32 %v251, 0.04025301
        %v266 = vmul.f32 %v255, 0.009809394
        %v267 = vmul.f32 %v257, 0.009809394
        %v268 = vadd.f32 %v264, %v266
        %v269 = vadd.f32 %v265, %v267
        %v270 = vmul.f32 %v261, -0.1139001
        %v271 = vmul.f32 %v263, -0.1139001
        %v272 = vadd.f32 %v268, %v270
        %v273 = vadd.f32 %v269, %v271
        %v274 = vmax.f32 %v272, 0.0
        %v275 = vmax.f32 %v273, 0.0
        %v276 = vmul.f32 %v274, -3.7301881
        %v277 = vmul.f32 %v275, -3.7301881
        %v278 = vmul.f32 %v276, 1.442695
        %v279 = vpow.pop %v278
        %v280 = vmul.f32 %v277, 1.442695
        %v281 = vpow.pop %v280
        %v282 = vmul.f32 %v279, 0.2125
        %v283 = vmul.f32 %v281, 0.2125
        %v284 = vmul.f32 %v274, -7.874841
        %v285 = vmul.f32 %v275, -7.874841
        %v286 = vmul.f32 %v284, 1.442695
        %v287 = vpow.pop %v286
        %v288 = vmul.f32 %v285, 1.442695
        %v289 = vpow.pop %v288
        %v290 = vmul.f32 %v287, 0.7154
        %v291 = vmul.f32 %v289, 0.7154
        %v292 = vadd.f32 %v282, %v290
        %v293 = vadd.f32 %v283, %v291
        %v294 = vmul.f32 %v274, -10.776098
        %v295 = vmul.f32 %v275, -10.776098
        %v296 = vmul.f32 %v294, 1.442695
        %v297 = vpow.pop %v296
        %v298 = vmul.f32 %v295, 1.442695
        %v299 = vpow.pop %v298
        %v300 = vmul.f32 %v297, 0.0721
        %v301 = vmul.f32 %v299, 0.0721
        %v302 = vadd.f32 %v292, %v300
        %v303 = vadd.f32 %v293, %v301
        %v304 = vmax.f32 %v302, 0.0
        %v305 = vmax.f32 %v303, 0.0
        %v306 = vmin.f32 %v304, 1.0
        %v307 = vmin.f32 %v305, 1.0
        %v308 = vadd.f32 %v306, 0.018075528
        %v309 = vadd.f32 %v307, 0.018075528
        %v310 = vlog2.pop %v308
        %v311 = vmul.f32 %v310, 0.6931472
        %v312 = vlog2.pop %v309
        %v313 = vmul.f32 %v312, 0.6931472
        %v314 = vsub.f32 0.0, %v311
        %v315 = vsub.f32 0.0, %v313
        %v316 = vmul.f32 %v314, 0.4342945
        %v317 = vmul.f32 %v315, 0.4342945
        %v318 = vmax.f32 %v316, 0.0
        %v319 = vmax.f32 %v317, 0.0
        %vm320 = vcmp.gt.f32.partialorder %v318, 0.0
        %vm321 = vcmp.gt.f32.partialorder %v319, 0.0
        %v322 = vmax.f32 %v318, 1e-30
        %v323 = vmax.f32 %v319, 1e-30
        %v324 = vlog2.pop %v322
        %v325 = vmul.f32 %v324, 0.6931472
        %v326 = vlog2.pop %v323
        %v327 = vmul.f32 %v326, 0.6931472
        %v328 = vmul.f32 %v325, 1.8
        %v329 = vmul.f32 %v327, 1.8
        %v330 = vmul.f32 %v328, 1.442695
        %v331 = vpow.pop %v330
        %v332 = vmul.f32 %v329, 1.442695
        %v333 = vpow.pop %v332
        %v334 = vsel %vm320, %v331, 0.0
        %v335 = vsel %vm321, %v333, 0.0
        %vm336 = vcmp.lt.f32.partialorder %v334, 0.15
        %vm337 = vcmp.lt.f32.partialorder %v335, 0.15
        %v338 = vsel %vm336, 0.0, %v334
        %v339 = vsel %vm337, 0.0, %v335
        %vm340 = vcmp.lt.f32.partialorder %v334, 0.68
        %vm341 = vcmp.lt.f32.partialorder %v335, 0.68
        %v342 = vsel %vm340, 0.0, 1.0
        %v343 = vsel %vm341, 0.0, 1.0
        %344 = vxpose.xlu0.b32.start [1/16] %v334, 128
        %345 = vxpose.xlu0.b32.cont [2/16] %v335, 128
        %346 = vxpose.xlu0.b32.cont [3/16] 0.0, 128
        %347 = vxpose.xlu0.b32.cont [4/16] 0.0, 128
        %348 = vxpose.xlu0.b32.cont [5/16] 0.0, 128
        %349 = vxpose.xlu0.b32.cont [6/16] 0.0, 128
        %350 = vxpose.xlu0.b32.cont [7/16] 0.0, 128
        %351 = vxpose.xlu0.b32.cont [8/16] 0.0, 128
        %352 = vxpose.xlu0.b32.cont [9/16] 0.0, 128
        %353 = vxpose.xlu0.b32.cont [10/16] 0.0, 128
        %354 = vxpose.xlu0.b32.cont [11/16] 0.0, 128
        %355 = vxpose.xlu0.b32.cont [12/16] 0.0, 128
        %356 = vxpose.xlu0.b32.cont [13/16] 0.0, 128
        %357 = vxpose.xlu0.b32.cont [14/16] 0.0, 128
        %358 = vxpose.xlu0.b32.cont [15/16] 0.0, 128
        %359 = vxpose.xlu0.b32.end [16/16] 0.0, 128
        %v360 = vpop.trf.xlu0
        %v361 = vpop.trf.xlu0
        %v362 = vpop.trf.xlu0
        %v363 = vpop.trf.xlu0
        %v364 = vpop.trf.xlu0
        %v365 = vpop.trf.xlu0
        %v366 = vpop.trf.xlu0
        %v367 = vpop.trf.xlu0
        %v368 = vpop.trf.xlu0
        %v369 = vpop.trf.xlu0
        %v370 = vpop.trf.xlu0
        %v371 = vpop.trf.xlu0
        %v372 = vpop.trf.xlu0
        %v373 = vpop.trf.xlu0
        %v374 = vpop.trf.xlu0
        %v375 = vpop.trf.xlu0
        %vm376 = vcmask 130048
        %377 = vst.msk [vmem:[%s214] sm:$0xff] %vm376, %v360
        %378 = vst.msk [vmem:[%s214 + $0x8] sm:$0xff] %vm376, %v361
        %379 = vst.msk [vmem:[%s221] sm:$0xff] %vm376, %v342
        %380 = vst.msk [vmem:[%s221 + $0x8] sm:$0xff] %vm376, %v343
        %v381 = vsel %vm376, %v338, 0.0
        %v382 = vsel %vm376, %v339, 0.0
        %v383 = vadd.f32 %v381, %v382
        %384 = vadd.xlane.f32.xlu0 %v383
        %v385 = vpop.xlane.xlu0 %384
        %v386 = vrot.slane %v385, 4
        %v387 = vadd.f32 %v385, %v386
        %v388 = vrot.slane %v387, 2
        %v389 = vadd.f32 %v387, %v388
        %v390 = vrot.slane %v389, 1
        %v391 = vadd.f32 %v389, %v390
        %s392 = vtos %v391
        %v393 = vstv %s392
        %vm394 = vcmask 0
        %395 = vst.msk [vmem:[%s237] sm:$0x1] %vm394, %v393
        %s396 = sand.u32 %s74, 1
        %s397 = scalar_lea.sflag [#allocation4], %s396
        %s398 = sand.u32 %s74, 1
        %s399 = smul.addr %s398, 16
        %s400 = scalar_lea.vmem [#allocation5], %s399
        %s401 = sand.u32 %s102, 1
        %s402 = scalar_lea.sflag [#allocation7], %s401
        %s403 = sand.u32 %s102, 1
        %s404 = smul.addr %s403, 16
        %s405 = scalar_lea.vmem [#allocation6], %s404
        %p406 = scmp.lt.s32.totalorder %s28, 1
        %s407 = scalar_select %p406, %s28, 1
        %p408 = scmp.lt.s32.totalorder %s29, 0
        %s409 = scalar_select %p408, %s29, 0
        %s410 = sadd.s32 %s409, %s407
        %s411 = scalar_lea.vmem %s3, %s410
        // Predicated region
        $region29: #{tpu_custom_call.1} parent=23 // pred_check
          %p412 = pneg %p84
        $region30: #{tpu_custom_call.1} parent=23 // pred_check_branch
          %414 = sbr.rel (%p412) target = $region32
        $region31: #{tpu_custom_call.1} parent=23 // pred_region
          %s416 = ssub.s32 256, 256
          %417 = vsyncadd %s397, %s416
          %s418 = smul.addr %s28, 2
          %s419 = sadd.s32 %s29, %s418
          %s420 = smul.addr %s419, 128
          %s421 = scalar_lea.hbm %s1, %s420
          %s422 = sshll.u32 %s400, 4
          %s423 = int_to_ptr.vmem [resolvable:$true] %s422
          %428 = dma.vmem_to_hbm [thread:$0]  %s423, 256, %s421, %s397, 128, 128, 8
        $region32: #{tpu_custom_call.1} parent=23 // pred_fallthru
          _
        // Predicated region
        $region33: #{tpu_custom_call.1} parent=23 // pred_check
          %p429 = pneg %p112
        $region34: #{tpu_custom_call.1} parent=23 // pred_check_branch
          %431 = sbr.rel (%p429) target = $region36
        $region35: #{tpu_custom_call.1} parent=23 // pred_region
          %s432 = smul.u32 2, %s29
          %s434 = ssub.s32 256, 256
          %435 = vsyncadd %s402, %s434
          %s436 = smul.addr %s28, 2
          %s437 = sadd.s32 %s432, %s436
          %s438 = smul.addr %s437, 128
          %s439 = scalar_lea.hbm %s2, %s438
          %s440 = sshll.u32 %s405, 4
          %s441 = int_to_ptr.vmem [resolvable:$true] %s440
          %446 = dma.vmem_to_hbm [thread:$0]  %s441, 256, %s439, %s402, 128, 128, 8
        $region36: #{tpu_custom_call.1} parent=23 // pred_fallthru
          _
        // Predicated region
        $region37: #{tpu_custom_call.1} parent=23 // pred_check
          %p447 = pneg %p140
        $region38: #{tpu_custom_call.1} parent=23 // pred_check_branch
          %449 = sbr.rel (%p447) target = $region40
        $region39: #{tpu_custom_call.1} parent=23 // pred_region
          _
        $region40: #{tpu_custom_call.1} parent=23 // pred_fallthru
          _
      $region24: #{tpu_custom_call.1} parent=5 // pred_fallthru
        _
      %p450 = scmp.le.s32.totalorder 2, %s19
      // Predicated region
      $region41: #{tpu_custom_call.1} parent=5 // pred_check
        %p451 = pneg %p450
      $region42: #{tpu_custom_call.1} parent=5 // pred_check_branch
        %453 = sbr.rel (%p451) target = $region44
      $region43: #{tpu_custom_call.1} parent=5 // pred_region
        %s454 = ssub.s32 %s19, 2
        // Predicated region
        $region45: #{tpu_custom_call.1} parent=43 // pred_check
          %p455 = pneg %p90
        $region46: #{tpu_custom_call.1} parent=43 // pred_check_branch
          %457 = sbr.rel (%p455) target = $region48
        $region47: #{tpu_custom_call.1} parent=43 // pred_region
          %s458 = sand.u32 %s75, 1
          %s459 = scalar_lea.sflag [#allocation4], %s458
          %s460 = sand.u32 %s75, 1
          %s461 = smul.addr %s460, 16
          %s462 = scalar_lea.vmem [#allocation5], %s461
          %463 = dma.done %s459, 256
        $region48: #{tpu_custom_call.1} parent=43 // pred_fallthru
          _
        // Predicated region
        $region49: #{tpu_custom_call.1} parent=43 // pred_check
          %p464 = pneg %p118
        $region50: #{tpu_custom_call.1} parent=43 // pred_check_branch
          %466 = sbr.rel (%p464) target = $region52
        $region51: #{tpu_custom_call.1} parent=43 // pred_region
          %s467 = sand.u32 %s103, 1
          %s468 = scalar_lea.sflag [#allocation7], %s467
          %s469 = sand.u32 %s103, 1
          %s470 = smul.addr %s469, 16
          %s471 = scalar_lea.vmem [#allocation6], %s470
          %472 = dma.done %s468, 256
        $region52: #{tpu_custom_call.1} parent=43 // pred_fallthru
          _
        // Predicated region
        $region53: #{tpu_custom_call.1} parent=43 // pred_check
          %p473 = pneg %p146
        $region54: #{tpu_custom_call.1} parent=43 // pred_check_branch
          %475 = sbr.rel (%p473) target = $region56
        $region55: #{tpu_custom_call.1} parent=43 // pred_region
          %p476 = scmp.lt.s32.totalorder %s30, 1
          %s477 = scalar_select %p476, %s30, 1
          %p478 = scmp.lt.s32.totalorder %s31, 0
          %s479 = scalar_select %p478, %s31, 0
          %s480 = sadd.s32 %s479, %s477
          %s481 = scalar_lea.vmem %s3, %s480
        $region56: #{tpu_custom_call.1} parent=43 // pred_fallthru
          _
      $region44: #{tpu_custom_call.1} parent=5 // pred_fallthru
        _
    $region6: #{tpu_custom_call.1} parent=1 // loop_footer
      %s23 = sadd.s32 1, %s19
    $region7: #{tpu_custom_call.1} parent=1 // loop_footer_branch
      %18 = sbr.rel target = $region3
    $region8: #{tpu_custom_call.1} parent=1 // loop_exit
      _
    %482 = vsyncpa [#allocation3], 1
    %s483 = scalar_lea.sflag [#allocation3], 1
    %484 = vsyncpa %s483, 1
    %485 = vsyncpa [#allocation4], 1
    %s486 = scalar_lea.sflag [#allocation4], 1
    %487 = vsyncpa %s486, 1
    %488 = vsyncpa [#allocation7], 1
    %s489 = scalar_lea.sflag [#allocation7], 1
    %490 = vsyncpa %s489, 1

</llo_original>
